<compile_context>
chip_gen: v6e
topology: v6e:2x2x1
jax: 0.10.0
libtpu: 0.0.40
codegen_flags: <defaults>
</compile_context>

<pallas_src>
import jax
import jax.numpy as jnp
from jax import lax
from jax.experimental import pallas as pl
from jax.experimental.pallas import tpu as pltpu


def _round_up(x, m):
    return (x + m - 1) // m * m


def cbow_kernel(idx_ref,   # VMEM (TB, C)      int32    context-word ids
                emb_ref,   # VMEM (V_pad, E)   bf16/f32 embedding table (vocab-padded)
                w1_ref,    # VMEM (E, H)       bf16/f32 linear1 weight (transposed)
                b1_ref,    # VMEM (1, H)       f32
                w2_ref,    # VMEM (H, V_pad)   bf16/f32 linear2 weight (transposed)
                b2_ref,    # VMEM (1, V_pad)   f32      (-1e30 on padded cols)
                out_ref):  # VMEM (TB, V_pad)  f32      log-probabilities
    TB, C = idx_ref.shape
    V_pad = emb_ref.shape[0]
    cdt = emb_ref.dtype                                   # MXU input dtype

    idx = idx_ref[...]                                    # (TB, C) int32

    # --- embedding bag as a one-hot-count matmul (runs on the MXU) ----------
    # Accumulate counts in int32 (one compare + one add per context slot) and
    # convert to the matmul dtype once; counts <= C so the value is exact even
    # in bf16.
    vocab_iota = lax.broadcasted_iota(jnp.int32, (TB, V_pad), 1)
    counts = (idx[:, 0:1] == vocab_iota).astype(jnp.int32)
    for c in range(1, C):                                 # C is small & static
        counts = counts + (idx[:, c:c + 1] == vocab_iota).astype(jnp.int32)

    bag = jnp.dot(counts.astype(cdt), emb_ref[...],
                  preferred_element_type=jnp.float32)     # (TB, E) f32

    # --- linear1 + ReLU ------------------------------------------------------
    h = jnp.dot(bag.astype(cdt), w1_ref[...],
                preferred_element_type=jnp.float32)
    h = jnp.maximum(h + b1_ref[...], 0.0)                 # (TB, H) f32

    # --- linear2 -------------------------------------------------------------
    logits = jnp.dot(h.astype(cdt), w2_ref[...],
                     preferred_element_type=jnp.float32)
    logits = logits + b2_ref[...]                         # (TB, V_pad) f32

    # --- log_softmax over the vocab dimension (padded cols masked by -1e30) --
    m = jnp.max(logits, axis=-1, keepdims=True)
    z = logits - m
    lse = jnp.log(jnp.sum(jnp.exp(z), axis=-1, keepdims=True))
    out_ref[...] = z - lse


def prepare_cbow_params(emb_table, w1_t, b1, w2_t, b2, *,
                        compute_dtype=jnp.bfloat16):
    """One-time parameter prep: pad vocab to 128 lanes, cast MXU inputs.

    Done once per parameter set so repeated forward calls do not re-materialize
    padded copies of the embedding table / W2 in HBM on every call.
    """
    V, E = emb_table.shape
    H = w1_t.shape[1]
    V_pad = _round_up(V, 128)

    emb_p = jnp.zeros((V_pad, E), compute_dtype).at[:V, :].set(
        jnp.asarray(emb_table, compute_dtype))
    w1_p = jnp.asarray(w1_t, compute_dtype)
    b1_p = jnp.asarray(b1, jnp.float32).reshape(1, H)
    w2_p = jnp.zeros((H, V_pad), compute_dtype).at[:, :V].set(
        jnp.asarray(w2_t, compute_dtype))
    # -1e30 on padded vocab columns -> exp underflows to 0 in the log-softmax.
    b2_p = jnp.full((1, V_pad), -1e30, jnp.float32).at[:, :V].set(
        jnp.asarray(b2, jnp.float32).reshape(1, V))

    return {"emb": emb_p, "w1": w1_p, "b1": b1_p, "w2": w2_p, "b2": b2_p,
            "V": V, "E": E, "H": H, "V_pad": V_pad}


def cbow_forward_batched(indices, params, *, batch_tile=128):
    """indices: [B, C] int  ->  [B, vocab] f32 log-probabilities."""
    B, C = indices.shape
    V, E, H, V_pad = params["V"], params["E"], params["H"], params["V_pad"]
    emb_p, w1_p, b1_p = params["emb"], params["w1"], params["b1"]
    w2_p, b2_p = params["w2"], params["b2"]

    # --- batch tiling ---------------------------------------------------------
    # TB is a multiple of 8 sublanes; shrink it (when B allows) so the grid has
    # >= 2 steps and "parallel" can shard across v7x's two TensorCores.
    # For very large batches on v6e/v7x, raise batch_tile to 256 (256x256 MXU).
    TB = min(_round_up(B, 8), batch_tile)
    while TB > 8 and _round_up(B, TB) // TB < 2:
        TB = max(8, _round_up(TB // 2, 8))
    B_pad = _round_up(B, TB)
    idx_p = jnp.zeros((B_pad, C), jnp.int32).at[:B, :].set(
        jnp.asarray(indices, jnp.int32))
    grid = (B_pad // TB,)

    # --- VMEM budget (advisory; clamped to v7x's 64 MiB physical VMEM) -------
    weight_bytes = (emb_p.size * emb_p.dtype.itemsize
                    + w1_p.size * w1_p.dtype.itemsize
                    + w2_p.size * w2_p.dtype.itemsize
                    + (b1_p.size + b2_p.size) * 4)
    tile_bytes = 2 * TB * C * 4 + 2 * TB * V_pad * 4      # idx/out double-buffered
    tmp_bytes = 4 * TB * V_pad * 4                        # counts/logits temporaries
    vmem_limit = int(min(max(2 * (weight_bytes + tile_bytes + tmp_bytes),
                             32 * 1024 * 1024),
                         64 * 1024 * 1024))

    once = pl.Buffered(1)   # grid-invariant operands: single buffer, fetched once

    out = pl.pallas_call(
        cbow_kernel,
        out_shape=jax.ShapeDtypeStruct((B_pad, V_pad), jnp.float32),
        grid_spec=pltpu.PrefetchScalarGridSpec(
            num_scalar_prefetch=0,
            grid=grid,
            in_specs=[
                pl.BlockSpec((TB, C), lambda i: (i, 0)),            # indices (tiled)
                pl.BlockSpec((V_pad, E), lambda i: (0, 0), pipeline_mode=once),
                pl.BlockSpec((E, H), lambda i: (0, 0), pipeline_mode=once),
                pl.BlockSpec((1, H), lambda i: (0, 0), pipeline_mode=once),
                pl.BlockSpec((H, V_pad), lambda i: (0, 0), pipeline_mode=once),
                pl.BlockSpec((1, V_pad), lambda i: (0, 0), pipeline_mode=once),
            ],
            out_specs=pl.BlockSpec((TB, V_pad), lambda i: (i, 0)),
        ),
        compiler_params=pltpu.CompilerParams(
            dimension_semantics=("parallel",),
            vmem_limit_bytes=vmem_limit),
    )(idx_p, emb_p, w1_p, b1_p, w2_p, b2_p)

    return out[:B, :V]


def cbow_forward(indices, params):
    """Original module semantics: 1-D context ids -> [1, vocab] log-probs."""
    return cbow_forward_batched(jnp.asarray(indices).reshape(1, -1), params)


def cbow_reference_batched(indices, emb_table, w1_t, b1, w2_t, b2):
    bag = jnp.sum(emb_table[indices], axis=1)             # (B, E)
    h = jnp.maximum(bag @ w1_t + b1, 0.0)
    logits = h @ w2_t + b2
    return jax.nn.log_softmax(logits, axis=-1)


if __name__ == "__main__":
    vocab_size = 150        # non-multiple of 128 -> exercises vocab pad + mask
    embedding_dim = 32
    hidden = 128            # fixed by the module: nn.Linear(embedding_dim, 128)
    context_size = 8
    batch = 96              # tiled as 2 x 48 so the grid can megacore-shard

    key = jax.random.PRNGKey(0)
    k_emb, k_w1, k_b1, k_w2, k_b2, k_idx = jax.random.split(key, 6)

    emb_table = jax.random.normal(k_emb, (vocab_size, embedding_dim), jnp.float32)
    lim1 = 1.0 / jnp.sqrt(embedding_dim)
    w1_t = jax.random.uniform(k_w1, (embedding_dim, hidden), jnp.float32, -lim1, lim1)
    b1 = jax.random.uniform(k_b1, (1, hidden), jnp.float32, -lim1, lim1)
    lim2 = 1.0 / jnp.sqrt(hidden)
    w2_t = jax.random.uniform(k_w2, (hidden, vocab_size), jnp.float32, -lim2, lim2)
    b2 = jax.random.uniform(k_b2, (1, vocab_size), jnp.float32, -lim2, lim2)

    indices = jax.random.randint(k_idx, (batch, context_size), 0, vocab_size,
                                 jnp.int32)

    ref_b = cbow_reference_batched(indices, emb_table, w1_t, b1, w2_t, b2)

    # --- bf16-input MXU path (the performance path; ~1e-2-level error) -------
    params_bf16 = prepare_cbow_params(emb_table, w1_t, b1, w2_t, b2)   # one-time
    out_b = jax.block_until_ready(cbow_forward_batched(indices, params_bf16))
    assert out_b.shape == (batch, vocab_size)
    assert jnp.allclose(out_b, ref_b, atol=1e-1, rtol=1e-2), \
        float(jnp.max(jnp.abs(out_b - ref_b)))

    # --- f32 fallback path (tight-tolerance numerical check) -----------------
    params_f32 = prepare_cbow_params(emb_table, w1_t, b1, w2_t, b2,
                                     compute_dtype=jnp.float32)
    out_f = jax.block_until_ready(cbow_forward_batched(indices, params_f32))
    assert jnp.allclose(out_f, ref_b, atol=1e-4, rtol=1e-4), \
        float(jnp.max(jnp.abs(out_f - ref_b)))

    # --- single-context path (matches the PyTorch module's forward) ----------
    out_1 = jax.block_until_ready(cbow_forward(indices[0], params_bf16))
    assert out_1.shape == (1, vocab_size)
    assert jnp.allclose(out_1, ref_b[0:1], atol=1e-1, rtol=1e-2)

    print("KERNEL_OK")
</pallas_src>

<mosaic_0001>
module attributes {stable_mosaic.version = 11 : i64} {
  func.func @cbow_kernel(%arg0: i32, %arg1: memref<48x8xi32, #tpu.memory_space<vmem>>, %arg2: memref<256x32xbf16, #tpu.memory_space<vmem>>, %arg3: memref<32x128xbf16, #tpu.memory_space<vmem>>, %arg4: memref<1x128xf32, #tpu.memory_space<vmem>>, %arg5: memref<128x256xbf16, #tpu.memory_space<vmem>>, %arg6: memref<1x256xf32, #tpu.memory_space<vmem>>, %arg7: memref<48x256xf32, #tpu.memory_space<vmem>>) attributes {dimension_semantics = [#tpu.dimension_semantics<parallel>], iteration_bounds = array<i64: 2>, scalar_prefetch = 0 : i64, scratch_operands = 0 : i64, tpu.core_type = #tpu.core_type<tc>, window_params = [{transform_indices = @transform_0, window_bounds = array<i64: 48, 8>}, {pipeline_mode = #tpu.pipeline_mode<synchronous>, transform_indices = @transform_1, window_bounds = array<i64: 256, 32>}, {pipeline_mode = #tpu.pipeline_mode<synchronous>, transform_indices = @transform_2, window_bounds = array<i64: 32, 128>}, {pipeline_mode = #tpu.pipeline_mode<synchronous>, transform_indices = @transform_3, window_bounds = array<i64: 1, 128>}, {pipeline_mode = #tpu.pipeline_mode<synchronous>, transform_indices = @transform_4, window_bounds = array<i64: 128, 256>}, {pipeline_mode = #tpu.pipeline_mode<synchronous>, transform_indices = @transform_5, window_bounds = array<i64: 1, 256>}, {transform_indices = @transform_6, window_bounds = array<i64: 48, 256>}]} {
    %c0 = arith.constant 0 : index
    %c0_0 = arith.constant 0 : index
    %0 = vector.load %arg1[%c0, %c0_0] : memref<48x8xi32, #tpu.memory_space<vmem>>, vector<48x8xi32>
    %1 = tpu.iota {dimensions = array<i32: 1>} : vector<48x256xi32>
    %2 = vector.extract_strided_slice %0 {offsets = [0, 0], sizes = [48, 1], strides = [1, 1]} : vector<48x8xi32> to vector<48x1xi32>
    %3 = vector.broadcast %2 : vector<48x1xi32> to vector<48x256xi32>
    %4 = arith.cmpi eq, %3, %1 : vector<48x256xi32>
    %5 = arith.extui %4 : vector<48x256xi1> to vector<48x256xi32>
    %6 = vector.extract_strided_slice %0 {offsets = [0, 1], sizes = [48, 1], strides = [1, 1]} : vector<48x8xi32> to vector<48x1xi32>
    %7 = vector.broadcast %6 : vector<48x1xi32> to vector<48x256xi32>
    %8 = arith.cmpi eq, %7, %1 : vector<48x256xi32>
    %9 = arith.extui %8 : vector<48x256xi1> to vector<48x256xi32>
    %10 = arith.addi %5, %9 : vector<48x256xi32>
    %11 = vector.extract_strided_slice %0 {offsets = [0, 2], sizes = [48, 1], strides = [1, 1]} : vector<48x8xi32> to vector<48x1xi32>
    %12 = vector.broadcast %11 : vector<48x1xi32> to vector<48x256xi32>
    %13 = arith.cmpi eq, %12, %1 : vector<48x256xi32>
    %14 = arith.extui %13 : vector<48x256xi1> to vector<48x256xi32>
    %15 = arith.addi %10, %14 : vector<48x256xi32>
    %16 = vector.extract_strided_slice %0 {offsets = [0, 3], sizes = [48, 1], strides = [1, 1]} : vector<48x8xi32> to vector<48x1xi32>
    %17 = vector.broadcast %16 : vector<48x1xi32> to vector<48x256xi32>
    %18 = arith.cmpi eq, %17, %1 : vector<48x256xi32>
    %19 = arith.extui %18 : vector<48x256xi1> to vector<48x256xi32>
    %20 = arith.addi %15, %19 : vector<48x256xi32>
    %21 = vector.extract_strided_slice %0 {offsets = [0, 4], sizes = [48, 1], strides = [1, 1]} : vector<48x8xi32> to vector<48x1xi32>
    %22 = vector.broadcast %21 : vector<48x1xi32> to vector<48x256xi32>
    %23 = arith.cmpi eq, %22, %1 : vector<48x256xi32>
    %24 = arith.extui %23 : vector<48x256xi1> to vector<48x256xi32>
    %25 = arith.addi %20, %24 : vector<48x256xi32>
    %26 = vector.extract_strided_slice %0 {offsets = [0, 5], sizes = [48, 1], strides = [1, 1]} : vector<48x8xi32> to vector<48x1xi32>
    %27 = vector.broadcast %26 : vector<48x1xi32> to vector<48x256xi32>
    %28 = arith.cmpi eq, %27, %1 : vector<48x256xi32>
    %29 = arith.extui %28 : vector<48x256xi1> to vector<48x256xi32>
    %30 = arith.addi %25, %29 : vector<48x256xi32>
    %31 = vector.extract_strided_slice %0 {offsets = [0, 6], sizes = [48, 1], strides = [1, 1]} : vector<48x8xi32> to vector<48x1xi32>
    %32 = vector.broadcast %31 : vector<48x1xi32> to vector<48x256xi32>
    %33 = arith.cmpi eq, %32, %1 : vector<48x256xi32>
    %34 = arith.extui %33 : vector<48x256xi1> to vector<48x256xi32>
    %35 = arith.addi %30, %34 : vector<48x256xi32>
    %36 = vector.extract_strided_slice %0 {offsets = [0, 7], sizes = [48, 1], strides = [1, 1]} : vector<48x8xi32> to vector<48x1xi32>
    %37 = vector.broadcast %36 : vector<48x1xi32> to vector<48x256xi32>
    %38 = arith.cmpi eq, %37, %1 : vector<48x256xi32>
    %39 = arith.extui %38 : vector<48x256xi1> to vector<48x256xi32>
    %40 = arith.addi %35, %39 : vector<48x256xi32>
    %41 = arith.sitofp %40 : vector<48x256xi32> to vector<48x256xbf16>
    %c0_1 = arith.constant 0 : index
    %c0_2 = arith.constant 0 : index
    %42 = vector.load %arg2[%c0_1, %c0_2] : memref<256x32xbf16, #tpu.memory_space<vmem>>, vector<256x32xbf16>
    %cst = arith.constant dense<0.000000e+00> : vector<48x32xf32>
    %43 = tpu.matmul %41, %42, %cst {dimension_numbers = #tpu.dot_dimension_numbers<[1], [0], [0], [1], [0, 0, 1, 1], [], []>} : vector<48x256xbf16>, vector<256x32xbf16>, vector<48x32xf32> -> vector<48x32xf32>
    %44 = arith.truncf %43 : vector<48x32xf32> to vector<48x32xbf16>
    %c0_3 = arith.constant 0 : index
    %c0_4 = arith.constant 0 : index
    %45 = vector.load %arg3[%c0_3, %c0_4] : memref<32x128xbf16, #tpu.memory_space<vmem>>, vector<32x128xbf16>
    %cst_5 = arith.constant dense<0.000000e+00> : vector<48x128xf32>
    %46 = tpu.matmul %44, %45, %cst_5 {dimension_numbers = #tpu.dot_dimension_numbers<[1], [0], [0], [1], [0, 0, 1, 1], [], []>} : vector<48x32xbf16>, vector<32x128xbf16>, vector<48x128xf32> -> vector<48x128xf32>
    %c0_6 = arith.constant 0 : index
    %c0_7 = arith.constant 0 : index
    %47 = vector.load %arg4[%c0_6, %c0_7] : memref<1x128xf32, #tpu.memory_space<vmem>>, vector<1x128xf32>
    %48 = vector.broadcast %47 : vector<1x128xf32> to vector<48x128xf32>
    %49 = arith.addf %46, %48 : vector<48x128xf32>
    %cst_8 = arith.constant 0.000000e+00 : f32
    %50 = vector.broadcast %cst_8 : f32 to vector<48x128xf32>
    %51 = arith.maximumf %49, %50 : vector<48x128xf32>
    %52 = arith.truncf %51 : vector<48x128xf32> to vector<48x128xbf16>
    %c0_9 = arith.constant 0 : index
    %c0_10 = arith.constant 0 : index
    %53 = vector.load %arg5[%c0_9, %c0_10] : memref<128x256xbf16, #tpu.memory_space<vmem>>, vector<128x256xbf16>
    %cst_11 = arith.constant dense<0.000000e+00> : vector<48x256xf32>
    %54 = tpu.matmul %52, %53, %cst_11 {dimension_numbers = #tpu.dot_dimension_numbers<[1], [0], [0], [1], [0, 0, 1, 1], [], []>} : vector<48x128xbf16>, vector<128x256xbf16>, vector<48x256xf32> -> vector<48x256xf32>
    %c0_12 = arith.constant 0 : index
    %c0_13 = arith.constant 0 : index
    %55 = vector.load %arg6[%c0_12, %c0_13] : memref<1x256xf32, #tpu.memory_space<vmem>>, vector<1x256xf32>
    %56 = vector.broadcast %55 : vector<1x256xf32> to vector<48x256xf32>
    %57 = arith.addf %54, %56 : vector<48x256xf32>
    %cst_14 = arith.constant dense<0xFF800000> : vector<48xf32>
    %58 = vector.multi_reduction <maximumf>, %57, %cst_14 [1] : vector<48x256xf32> to vector<48xf32>
    %59 = vector.shape_cast %58 : vector<48xf32> to vector<48x1xf32>
    %60 = vector.broadcast %59 : vector<48x1xf32> to vector<48x256xf32>
    %61 = arith.subf %57, %60 : vector<48x256xf32>
    %62 = math.exp %61 : vector<48x256xf32>
    %cst_15 = arith.constant dense<0.000000e+00> : vector<48xf32>
    %63 = vector.multi_reduction <add>, %62, %cst_15 [1] : vector<48x256xf32> to vector<48xf32>
    %64 = vector.shape_cast %63 : vector<48xf32> to vector<48x1xf32>
    %65 = math.log %64 : vector<48x1xf32>
    %66 = vector.broadcast %65 : vector<48x1xf32> to vector<48x256xf32>
    %67 = arith.subf %61, %66 : vector<48x256xf32>
    %c0_16 = arith.constant 0 : index
    %c0_17 = arith.constant 0 : index
    %68 = vector.load %arg7[%c0_16, %c0_17] : memref<48x256xf32, #tpu.memory_space<vmem>>, vector<48x256xf32>
    tpu.vector_store %arg7[%c0_16, %c0_17], %67 {strides = array<i32>} : memref<48x256xf32, #tpu.memory_space<vmem>>, vector<48x256xf32>,
    return
  }
  func.func @transform_0(%arg0: i32) -> (i32, i32) {
    %c0_i32 = arith.constant 0 : i32
    %c0_i32_0 = arith.constant 0 : i32
    return %arg0, %c0_i32 : i32, i32
  }
  func.func @transform_1(%arg0: i32) -> (i32, i32) {
    %c0_i32 = arith.constant 0 : i32
    %c0_i32_0 = arith.constant 0 : i32
    %c0_i32_1 = arith.constant 0 : i32
    return %c0_i32, %c0_i32_0 : i32, i32
  }
  func.func @transform_2(%arg0: i32) -> (i32, i32) {
    %c0_i32 = arith.constant 0 : i32
    %c0_i32_0 = arith.constant 0 : i32
    %c0_i32_1 = arith.constant 0 : i32
    return %c0_i32, %c0_i32_0 : i32, i32
  }
  func.func @transform_3(%arg0: i32) -> (i32, i32) {
    %c0_i32 = arith.constant 0 : i32
    %c0_i32_0 = arith.constant 0 : i32
    %c0_i32_1 = arith.constant 0 : i32
    return %c0_i32, %c0_i32_0 : i32, i32
  }
  func.func @transform_4(%arg0: i32) -> (i32, i32) {
    %c0_i32 = arith.constant 0 : i32
    %c0_i32_0 = arith.constant 0 : i32
    %c0_i32_1 = arith.constant 0 : i32
    return %c0_i32, %c0_i32_0 : i32, i32
  }
  func.func @transform_5(%arg0: i32) -> (i32, i32) {
    %c0_i32 = arith.constant 0 : i32
    %c0_i32_0 = arith.constant 0 : i32
    %c0_i32_1 = arith.constant 0 : i32
    return %c0_i32, %c0_i32_0 : i32, i32
  }
  func.func @transform_6(%arg0: i32) -> (i32, i32) {
    %c0_i32 = arith.constant 0 : i32
    %c0_i32_0 = arith.constant 0 : i32
    return %arg0, %c0_i32 : i32, i32
  }
}

</mosaic_0001>

<llo_original>
// kernel: tpu_custom_call.1
$region0: #{tpu_custom_call.1}
  #allocation0 [shape = 'u32[]', space=smem, size = 0x4, offset = 0x4, fixed_abs, tag = 'smem constant byte address 0x4 - core index']
  #allocation1 [shape = 'u32[144,128]{1,0:T(1,128)}', space=vmem, size = 0x12000, scoped, tag = 'internal scratch']
  %s0 = inlined_call_operand.vmem [shape: s32[96,8], index: 0, kind: input, shape index: {}]
  %s1 = inlined_call_operand.vmem [shape: bf16[256,32], index: 1, kind: input, shape index: {}]
  %s2 = inlined_call_operand.vmem [shape: bf16[32,128], index: 2, kind: input, shape index: {}]
  %s3 = inlined_call_operand.vmem [shape: f32[1,128], index: 3, kind: input, shape index: {}]
  %s4 = inlined_call_operand.vmem [shape: bf16[128,256], index: 4, kind: input, shape index: {}]
  %s5 = inlined_call_operand.vmem [shape: f32[1,256], index: 5, kind: input, shape index: {}]
  %s6 = inlined_call_operand.hbm [shape: f32[96,256], index: 6, kind: output, shape index: {}]
  %s7 = sld [smem:[#allocation0]]
  $region57: #{tpu_custom_call.1} parent=0
    _
  %s9 = ssub.s32 1, %s7
  %s10 = scalar_select 0, %s9, %s7
  $region1: #{tpu_custom_call.1} parent=0
    #allocation2 [shape = 'u8[98304]{0}', space=vmem, size = 0x18000, scoped, tag = 'output window, operand 0']
    #allocation3 [shape = 's32[2]{0}', space=sflag, size = 0x8, scoped, tag = 'scoped memory for tpu_custom_call.1']
    %11 = vsyncpa [#allocation3], 0
    %s12 = scalar_lea.sflag [#allocation3], 1
    %13 = vsyncpa %s12, 0
    loop: start=0, step=1, limit=4
    $region2: #{tpu_custom_call.1} parent=1 // loop_pre_header
      _
    $region3: #{tpu_custom_call.1} parent=1 // loop_header
      %s15 = sphi 0, %s19
      %p16 = scmp.ge.s32.totalorder %s15, 4
      %s25 = sphi 0, %s27
      %s28 = sphi 0, %s25
      %s29 = sphi 0, %s28
      %s45 = sphi 0, %s29
      %s49 = sphi 0, %s49
      %s51 = sphi 0, %s49
      %s52 = sphi 0, %s51
      %s66 = sphi 0, %s52
      %s70 = sphi 0, %s70
      %s72 = sphi 0, %s70
      %s73 = sphi 0, %s72
      %s87 = sphi 0, %s73
      %s91 = sphi 0, %s91
      %s93 = sphi 0, %s91
      %s94 = sphi 0, %s93
      %s108 = sphi 0, %s94
      %s112 = sphi 0, %s112
      %s114 = sphi 0, %s112
      %s115 = sphi 0, %s114
      %s129 = sphi 0, %s115
      %s133 = sphi 0, %s133
      %s135 = sphi 0, %s133
      %s136 = sphi 0, %s135
      %s150 = sphi 0, %s136
      %s156 = sphi 0, %s158
      %s159 = sphi 0, %s156
      %s160 = sphi 0, %s159
      %s176 = sphi 0, %s160
    $region4: #{tpu_custom_call.1} parent=1 // loop_header_branch
      %18 = sbr.rel (%p16) target = $region8
    $region5: #{tpu_custom_call.1} parent=1 // loop_body
      %s20 = ssub.s32 %s15, 1
      %s21 = ssub.s32 %s15, 2
      %s22 = sadd.s32 %s15, 1
      %s23 = ssub.s32 %s15, %s22
      %p24 = scmp.eq.s32.totalorder %s23, 0
      %s26 = sadd.s32 %s25, 1
      %s27 = scalar_select %p24, %s25, %s26
      %p30 = pneg %p24
      %p31 = scmp.eq.s32.totalorder %s15, 1
      %p32 = por %p30, %p31
      %p33 = scmp.ne.s32.totalorder %s25, %s28
      %p34 = scmp.eq.s32.totalorder %s15, 0
      %p35 = por %p33, %p34
      %p36 = scmp.ne.s32.totalorder %s25, %s28
      %p37 = scmp.eq.s32.totalorder %s20, 1
      %p38 = por %p36, %p37
      %p39 = scmp.ne.s32.totalorder %s28, %s29
      %p40 = scmp.eq.s32.totalorder %s20, 0
      %p41 = por %p39, %p40
      %p42 = scmp.ne.s32.totalorder %s28, %s29
      %p43 = scmp.eq.s32.totalorder %s21, 1
      %p44 = por %p42, %p43
      %p46 = scmp.ne.s32.totalorder %s29, %s45
      %p47 = scmp.eq.s32.totalorder %s21, 0
      %p48 = por %p46, %p47
      %s50 = sadd.s32 %s49, 1
      %p53 = scmp.eq.s32.totalorder %s15, 1
      %p54 = scmp.ne.s32.totalorder %s49, %s51
      %p55 = scmp.eq.s32.totalorder %s15, 0
      %p56 = por %p54, %p55
      %p57 = scmp.ne.s32.totalorder %s49, %s51
      %p58 = scmp.eq.s32.totalorder %s20, 1
      %p59 = por %p57, %p58
      %p60 = scmp.ne.s32.totalorder %s51, %s52
      %p61 = scmp.eq.s32.totalorder %s20, 0
      %p62 = por %p60, %p61
      %p63 = scmp.ne.s32.totalorder %s51, %s52
      %p64 = scmp.eq.s32.totalorder %s21, 1
      %p65 = por %p63, %p64
      %p67 = scmp.ne.s32.totalorder %s52, %s66
      %p68 = scmp.eq.s32.totalorder %s21, 0
      %p69 = por %p67, %p68
      %s71 = sadd.s32 %s70, 1
      %p74 = scmp.eq.s32.totalorder %s15, 1
      %p75 = scmp.ne.s32.totalorder %s70, %s72
      %p76 = scmp.eq.s32.totalorder %s15, 0
      %p77 = por %p75, %p76
      %p78 = scmp.ne.s32.totalorder %s70, %s72
      %p79 = scmp.eq.s32.totalorder %s20, 1
      %p80 = por %p78, %p79
      %p81 = scmp.ne.s32.totalorder %s72, %s73
      %p82 = scmp.eq.s32.totalorder %s20, 0
      %p83 = por %p81, %p82
      %p84 = scmp.ne.s32.totalorder %s72, %s73
      %p85 = scmp.eq.s32.totalorder %s21, 1
      %p86 = por %p84, %p85
      %p88 = scmp.ne.s32.totalorder %s73, %s87
      %p89 = scmp.eq.s32.totalorder %s21, 0
      %p90 = por %p88, %p89
      %s92 = sadd.s32 %s91, 1
      %p95 = scmp.eq.s32.totalorder %s15, 1
      %p96 = scmp.ne.s32.totalorder %s91, %s93
      %p97 = scmp.eq.s32.totalorder %s15, 0
      %p98 = por %p96, %p97
      %p99 = scmp.ne.s32.totalorder %s91, %s93
      %p100 = scmp.eq.s32.totalorder %s20, 1
      %p101 = por %p99, %p100
      %p102 = scmp.ne.s32.totalorder %s93, %s94
      %p103 = scmp.eq.s32.totalorder %s20, 0
      %p104 = por %p102, %p103
      %p105 = scmp.ne.s32.totalorder %s93, %s94
      %p106 = scmp.eq.s32.totalorder %s21, 1
      %p107 = por %p105, %p106
      %p109 = scmp.ne.s32.totalorder %s94, %s108
      %p110 = scmp.eq.s32.totalorder %s21, 0
      %p111 = por %p109, %p110
      %s113 = sadd.s32 %s112, 1
      %p116 = scmp.eq.s32.totalorder %s15, 1
      %p117 = scmp.ne.s32.totalorder %s112, %s114
      %p118 = scmp.eq.s32.totalorder %s15, 0
      %p119 = por %p117, %p118
      %p120 = scmp.ne.s32.totalorder %s112, %s114
      %p121 = scmp.eq.s32.totalorder %s20, 1
      %p122 = por %p120, %p121
      %p123 = scmp.ne.s32.totalorder %s114, %s115
      %p124 = scmp.eq.s32.totalorder %s20, 0
      %p125 = por %p123, %p124
      %p126 = scmp.ne.s32.totalorder %s114, %s115
      %p127 = scmp.eq.s32.totalorder %s21, 1
      %p128 = por %p126, %p127
      %p130 = scmp.ne.s32.totalorder %s115, %s129
      %p131 = scmp.eq.s32.totalorder %s21, 0
      %p132 = por %p130, %p131
      %s134 = sadd.s32 %s133, 1
      %p137 = scmp.eq.s32.totalorder %s15, 1
      %p138 = scmp.ne.s32.totalorder %s133, %s135
      %p139 = scmp.eq.s32.totalorder %s15, 0
      %p140 = por %p138, %p139
      %p141 = scmp.ne.s32.totalorder %s133, %s135
      %p142 = scmp.eq.s32.totalorder %s20, 1
      %p143 = por %p141, %p142
      %p144 = scmp.ne.s32.totalorder %s135, %s136
      %p145 = scmp.eq.s32.totalorder %s20, 0
      %p146 = por %p144, %p145
      %p147 = scmp.ne.s32.totalorder %s135, %s136
      %p148 = scmp.eq.s32.totalorder %s21, 1
      %p149 = por %p147, %p148
      %p151 = scmp.ne.s32.totalorder %s136, %s150
      %p152 = scmp.eq.s32.totalorder %s21, 0
      %p153 = por %p151, %p152
      %s154 = ssub.s32 %s15, %s22
      %p155 = scmp.eq.s32.totalorder %s154, 0
      %s157 = sadd.s32 %s156, 1
      %s158 = scalar_select %p155, %s156, %s157
      %p161 = pneg %p155
      %p162 = scmp.eq.s32.totalorder %s15, 1
      %p163 = por %p161, %p162
      %p164 = scmp.ne.s32.totalorder %s156, %s159
      %p165 = scmp.eq.s32.totalorder %s15, 0
      %p166 = por %p164, %p165
      %p167 = scmp.ne.s32.totalorder %s156, %s159
      %p168 = scmp.eq.s32.totalorder %s20, 1
      %p169 = por %p167, %p168
      %p170 = scmp.ne.s32.totalorder %s159, %s160
      %p171 = scmp.eq.s32.totalorder %s20, 0
      %p172 = por %p170, %p171
      %p173 = scmp.ne.s32.totalorder %s159, %s160
      %p174 = scmp.eq.s32.totalorder %s21, 1
      %p175 = por %p173, %p174
      %p177 = scmp.ne.s32.totalorder %s160, %s176
      %p178 = scmp.eq.s32.totalorder %s21, 0
      %p179 = por %p177, %p178
      %p180 = scmp.le.s32.totalorder 1, %s15
      %p181 = scmp.lt.s32.totalorder %s15, 3
      %p182 = pnand %p180, %p181
      %p183 = pneg %p182
      // Predicated region
      $region9: #{tpu_custom_call.1} parent=5 // pred_check
        _
      $region10: #{tpu_custom_call.1} parent=5 // pred_check_branch
        %185 = sbr.rel (%p182) target = $region12
      $region11: #{tpu_custom_call.1} parent=5 // pred_region
        %s186 = ssub.s32 %s15, 1
        // Predicated region
        $region13: #{tpu_custom_call.1} parent=11 // pred_check
          %p187 = pneg %p62
        $region14: #{tpu_custom_call.1} parent=11 // pred_check_branch
          %189 = sbr.rel (%p187) target = $region16
        $region15: #{tpu_custom_call.1} parent=11 // pred_region
          _
        $region16: #{tpu_custom_call.1} parent=11 // pred_fallthru
          _
        // Predicated region
        $region17: #{tpu_custom_call.1} parent=11 // pred_check
          %p190 = pneg %p83
        $region18: #{tpu_custom_call.1} parent=11 // pred_check_branch
          %192 = sbr.rel (%p190) target = $region20
        $region19: #{tpu_custom_call.1} parent=11 // pred_region
          _
        $region20: #{tpu_custom_call.1} parent=11 // pred_fallthru
          _
        // Predicated region
        $region21: #{tpu_custom_call.1} parent=11 // pred_check
          %p193 = pneg %p104
        $region22: #{tpu_custom_call.1} parent=11 // pred_check_branch
          %195 = sbr.rel (%p193) target = $region24
        $region23: #{tpu_custom_call.1} parent=11 // pred_region
          _
        $region24: #{tpu_custom_call.1} parent=11 // pred_fallthru
          _
        // Predicated region
        $region25: #{tpu_custom_call.1} parent=11 // pred_check
          %p196 = pneg %p125
        $region26: #{tpu_custom_call.1} parent=11 // pred_check_branch
          %198 = sbr.rel (%p196) target = $region28
        $region27: #{tpu_custom_call.1} parent=11 // pred_region
          _
        $region28: #{tpu_custom_call.1} parent=11 // pred_fallthru
          _
        // Predicated region
        $region29: #{tpu_custom_call.1} parent=11 // pred_check
          %p199 = pneg %p146
        $region30: #{tpu_custom_call.1} parent=11 // pred_check_branch
          %201 = sbr.rel (%p199) target = $region32
        $region31: #{tpu_custom_call.1} parent=11 // pred_region
          _
        $region32: #{tpu_custom_call.1} parent=11 // pred_fallthru
          _
      $region12: #{tpu_custom_call.1} parent=5 // pred_fallthru
        _
      %p202 = scmp.lt.s32.totalorder %s15, 2
      // Predicated region
      $region33: #{tpu_custom_call.1} parent=5 // pred_check
        %p203 = pneg %p202
      $region34: #{tpu_custom_call.1} parent=5 // pred_check_branch
        %205 = sbr.rel (%p203) target = $region36
      $region35: #{tpu_custom_call.1} parent=5 // pred_region
        // Predicated region
        $region37: #{tpu_custom_call.1} parent=35 // pred_check
          %p206 = pneg %p35
        $region38: #{tpu_custom_call.1} parent=35 // pred_check_branch
          %208 = sbr.rel (%p206) target = $region40
        $region39: #{tpu_custom_call.1} parent=35 // pred_region
          %s209 = smul.u32 6, %s15
          %p210 = scmp.lt.s32.totalorder %s209, 11
          %s211 = scalar_select %p210, %s209, 11
          %s212 = smul.addr %s211, 8
          %s213 = scalar_lea.vmem %s0, %s212
          %s214 = smul.u32 6, %s15
        $region40: #{tpu_custom_call.1} parent=35 // pred_fallthru
          _
      $region36: #{tpu_custom_call.1} parent=5 // pred_fallthru
        _
      %p215 = scmp.le.s32.totalorder 1, %s15
      %p216 = scmp.lt.s32.totalorder %s15, 3
      %p217 = pnand %p215, %p216
      %p218 = pneg %p217
      // Predicated region
      $region41: #{tpu_custom_call.1} parent=5 // pred_check
        _
      $region42: #{tpu_custom_call.1} parent=5 // pred_check_branch
        %220 = sbr.rel (%p217) target = $region44
      $region43: #{tpu_custom_call.1} parent=5 // pred_region
        %s221 = ssub.s32 %s15, 1
        %s222 = smul.u32 6, %s20
        %p223 = scmp.lt.s32.totalorder %s222, 11
        %s224 = scalar_select %p223, %s222, 11
        %s225 = smul.addr %s224, 8
        %s226 = scalar_lea.vmem %s0, %s225
        %p227 = pneg %p41
        %p228 = pneg %p38
        %p229 = pneg %p62
        %p230 = pneg %p59
        %p231 = pneg %p83
        %p232 = pneg %p80
        %p233 = pneg %p104
        %p234 = pneg %p101
        %p235 = pneg %p125
        %p236 = pneg %p122
        %p237 = pneg %p146
        %p238 = pneg %p143
        %p239 = pneg %p172
        %p240 = pneg %p169
        %s241 = sand.u32 %s159, 1
        %s242 = scalar_lea.sflag [#allocation3], %s241
        %s243 = sand.u32 %s159, 1
        %s244 = smul.addr %s243, 96
        %s245 = scalar_lea.vmem [#allocation2], %s244
        %s246 = smul.u32 6, %s20
        %p247 = scmp.lt.s32.totalorder %s246, 11
        %s248 = scalar_select %p247, %s246, 11
        %s249 = smul.addr %s248, 8
        %s250 = scalar_lea.vmem %s0, %s249
        %s251 = smul.u32 6, %s20
        %s252 = smul.u32 6, %s20
        %v254 = vld [vmem:[%s250] sm:$0xff]
        %v255 = vld [vmem:[%s250 + $0x8] sm:$0xff]
        %v256 = vld [vmem:[%s250 + $0x10] sm:$0xff]
        %v257 = vld [vmem:[%s250 + $0x18] sm:$0xff]
        %v258 = vld [vmem:[%s250 + $0x20] sm:$0xff]
        %v259 = vld [vmem:[%s250 + $0x28] sm:$0xff]
        %v260 = vlaneseq
        %v261 = vand.u32 %v260, 127
        %v262 = vadd.s32 %v261, 128
        %263 = vset.pattern.permute.xlu0 0
        %264 = vperm.xlu0 %263, %v254
        %v265 = vpop.permute.xlu0 %264
        %266 = vset.pattern.permute.xlu0 0
        %267 = vperm.xlu0 %266, %v255
        %v268 = vpop.permute.xlu0 %267
        %269 = vset.pattern.permute.xlu0 0
        %270 = vperm.xlu0 %269, %v256
        %v271 = vpop.permute.xlu0 %270
        %272 = vset.pattern.permute.xlu0 0
        %273 = vperm.xlu0 %272, %v257
        %v274 = vpop.permute.xlu0 %273
        %275 = vset.pattern.permute.xlu0 0
        %276 = vperm.xlu0 %275, %v258
        %v277 = vpop.permute.xlu0 %276
        %278 = vset.pattern.permute.xlu0 0
        %279 = vperm.xlu0 %278, %v259
        %v280 = vpop.permute.xlu0 %279
        %vm281 = vcmp.eq.s32.totalorder %v265, %v261
        %vm282 = vcmp.eq.s32.totalorder %v265, %v262
        %vm283 = vcmp.eq.s32.totalorder %v268, %v261
        %vm284 = vcmp.eq.s32.totalorder %v268, %v262
        %vm285 = vcmp.eq.s32.totalorder %v271, %v261
        %vm286 = vcmp.eq.s32.totalorder %v271, %v262
        %vm287 = vcmp.eq.s32.totalorder %v274, %v261
        %vm288 = vcmp.eq.s32.totalorder %v274, %v262
        %vm289 = vcmp.eq.s32.totalorder %v277, %v261
        %vm290 = vcmp.eq.s32.totalorder %v277, %v262
        %vm291 = vcmp.eq.s32.totalorder %v280, %v261
        %vm292 = vcmp.eq.s32.totalorder %v280, %v262
        %v293 = vsel %vm281, 1, 0
        %v294 = vsel %vm282, 1, 0
        %v295 = vsel %vm283, 1, 0
        %v296 = vsel %vm284, 1, 0
        %v297 = vsel %vm285, 1, 0
        %v298 = vsel %vm286, 1, 0
        %v299 = vsel %vm287, 1, 0
        %v300 = vsel %vm288, 1, 0
        %v301 = vsel %vm289, 1, 0
        %v302 = vsel %vm290, 1, 0
        %v303 = vsel %vm291, 1, 0
        %v304 = vsel %vm292, 1, 0
        %305 = vset.pattern.permute.xlu0 1
        %306 = vperm.xlu0 %305, %v254
        %v307 = vpop.permute.xlu0 %306
        %308 = vset.pattern.permute.xlu0 1
        %309 = vperm.xlu0 %308, %v255
        %v310 = vpop.permute.xlu0 %309
        %311 = vset.pattern.permute.xlu0 1
        %312 = vperm.xlu0 %311, %v256
        %v313 = vpop.permute.xlu0 %312
        %314 = vset.pattern.permute.xlu0 1
        %315 = vperm.xlu0 %314, %v257
        %v316 = vpop.permute.xlu0 %315
        %317 = vset.pattern.permute.xlu0 1
        %318 = vperm.xlu0 %317, %v258
        %v319 = vpop.permute.xlu0 %318
        %320 = vset.pattern.permute.xlu0 1
        %321 = vperm.xlu0 %320, %v259
        %v322 = vpop.permute.xlu0 %321
        %vm323 = vcmp.eq.s32.totalorder %v307, %v261
        %vm324 = vcmp.eq.s32.totalorder %v307, %v262
        %vm325 = vcmp.eq.s32.totalorder %v310, %v261
        %vm326 = vcmp.eq.s32.totalorder %v310, %v262
        %vm327 = vcmp.eq.s32.totalorder %v313, %v261
        %vm328 = vcmp.eq.s32.totalorder %v313, %v262
        %vm329 = vcmp.eq.s32.totalorder %v316, %v261
        %vm330 = vcmp.eq.s32.totalorder %v316, %v262
        %vm331 = vcmp.eq.s32.totalorder %v319, %v261
        %vm332 = vcmp.eq.s32.totalorder %v319, %v262
        %vm333 = vcmp.eq.s32.totalorder %v322, %v261
        %vm334 = vcmp.eq.s32.totalorder %v322, %v262
        %v335 = vsel %vm323, 1, 0
        %v336 = vsel %vm324, 1, 0
        %v337 = vsel %vm325, 1, 0
        %v338 = vsel %vm326, 1, 0
        %v339 = vsel %vm327, 1, 0
        %v340 = vsel %vm328, 1, 0
        %v341 = vsel %vm329, 1, 0
        %v342 = vsel %vm330, 1, 0
        %v343 = vsel %vm331, 1, 0
        %v344 = vsel %vm332, 1, 0
        %v345 = vsel %vm333, 1, 0
        %v346 = vsel %vm334, 1, 0
        %v347 = vadd.s32 %v293, %v335
        %v348 = vadd.s32 %v294, %v336
        %v349 = vadd.s32 %v295, %v337
        %v350 = vadd.s32 %v296, %v338
        %v351 = vadd.s32 %v297, %v339
        %v352 = vadd.s32 %v298, %v340
        %v353 = vadd.s32 %v299, %v341
        %v354 = vadd.s32 %v300, %v342
        %v355 = vadd.s32 %v301, %v343
        %v356 = vadd.s32 %v302, %v344
        %v357 = vadd.s32 %v303, %v345
        %v358 = vadd.s32 %v304, %v346
        %359 = vset.pattern.permute.xlu0 2
        %360 = vperm.xlu0 %359, %v254
        %v361 = vpop.permute.xlu0 %360
        %362 = vset.pattern.permute.xlu0 2
        %363 = vperm.xlu0 %362, %v255
        %v364 = vpop.permute.xlu0 %363
        %365 = vset.pattern.permute.xlu0 2
        %366 = vperm.xlu0 %365, %v256
        %v367 = vpop.permute.xlu0 %366
        %368 = vset.pattern.permute.xlu0 2
        %369 = vperm.xlu0 %368, %v257
        %v370 = vpop.permute.xlu0 %369
        %371 = vset.pattern.permute.xlu0 2
        %372 = vperm.xlu0 %371, %v258
        %v373 = vpop.permute.xlu0 %372
        %374 = vset.pattern.permute.xlu0 2
        %375 = vperm.xlu0 %374, %v259
        %v376 = vpop.permute.xlu0 %375
        %vm377 = vcmp.eq.s32.totalorder %v361, %v261
        %vm378 = vcmp.eq.s32.totalorder %v361, %v262
        %vm379 = vcmp.eq.s32.totalorder %v364, %v261
        %vm380 = vcmp.eq.s32.totalorder %v364, %v262
        %vm381 = vcmp.eq.s32.totalorder %v367, %v261
        %vm382 = vcmp.eq.s32.totalorder %v367, %v262
        %vm383 = vcmp.eq.s32.totalorder %v370, %v261
        %vm384 = vcmp.eq.s32.totalorder %v370, %v262
        %vm385 = vcmp.eq.s32.totalorder %v373, %v261
        %vm386 = vcmp.eq.s32.totalorder %v373, %v262
        %vm387 = vcmp.eq.s32.totalorder %v376, %v261
        %vm388 = vcmp.eq.s32.totalorder %v376, %v262
        %v389 = vsel %vm377, 1, 0
        %v390 = vsel %vm378, 1, 0
        %v391 = vsel %vm379, 1, 0
        %v392 = vsel %vm380, 1, 0
        %v393 = vsel %vm381, 1, 0
        %v394 = vsel %vm382, 1, 0
        %v395 = vsel %vm383, 1, 0
        %v396 = vsel %vm384, 1, 0
        %v397 = vsel %vm385, 1, 0
        %v398 = vsel %vm386, 1, 0
        %v399 = vsel %vm387, 1, 0
        %v400 = vsel %vm388, 1, 0
        %v401 = vadd.s32 %v347, %v389
        %v402 = vadd.s32 %v348, %v390
        %v403 = vadd.s32 %v349, %v391
        %v404 = vadd.s32 %v350, %v392
        %v405 = vadd.s32 %v351, %v393
        %v406 = vadd.s32 %v352, %v394
        %v407 = vadd.s32 %v353, %v395
        %v408 = vadd.s32 %v354, %v396
        %v409 = vadd.s32 %v355, %v397
        %v410 = vadd.s32 %v356, %v398
        %v411 = vadd.s32 %v357, %v399
        %v412 = vadd.s32 %v358, %v400
        %413 = vset.pattern.permute.xlu0 3
        %414 = vperm.xlu0 %413, %v254
        %v415 = vpop.permute.xlu0 %414
        %416 = vset.pattern.permute.xlu0 3
        %417 = vperm.xlu0 %416, %v255
        %v418 = vpop.permute.xlu0 %417
        %419 = vset.pattern.permute.xlu0 3
        %420 = vperm.xlu0 %419, %v256
        %v421 = vpop.permute.xlu0 %420
        %422 = vset.pattern.permute.xlu0 3
        %423 = vperm.xlu0 %422, %v257
        %v424 = vpop.permute.xlu0 %423
        %425 = vset.pattern.permute.xlu0 3
        %426 = vperm.xlu0 %425, %v258
        %v427 = vpop.permute.xlu0 %426
        %428 = vset.pattern.permute.xlu0 3
        %429 = vperm.xlu0 %428, %v259
        %v430 = vpop.permute.xlu0 %429
        %vm431 = vcmp.eq.s32.totalorder %v415, %v261
        %vm432 = vcmp.eq.s32.totalorder %v415, %v262
        %vm433 = vcmp.eq.s32.totalorder %v418, %v261
        %vm434 = vcmp.eq.s32.totalorder %v418, %v262
        %vm435 = vcmp.eq.s32.totalorder %v421, %v261
        %vm436 = vcmp.eq.s32.totalorder %v421, %v262
        %vm437 = vcmp.eq.s32.totalorder %v424, %v261
        %vm438 = vcmp.eq.s32.totalorder %v424, %v262
        %vm439 = vcmp.eq.s32.totalorder %v427, %v261
        %vm440 = vcmp.eq.s32.totalorder %v427, %v262
        %vm441 = vcmp.eq.s32.totalorder %v430, %v261
        %vm442 = vcmp.eq.s32.totalorder %v430, %v262
        %v443 = vsel %vm431, 1, 0
        %v444 = vsel %vm432, 1, 0
        %v445 = vsel %vm433, 1, 0
        %v446 = vsel %vm434, 1, 0
        %v447 = vsel %vm435, 1, 0
        %v448 = vsel %vm436, 1, 0
        %v449 = vsel %vm437, 1, 0
        %v450 = vsel %vm438, 1, 0
        %v451 = vsel %vm439, 1, 0
        %v452 = vsel %vm440, 1, 0
        %v453 = vsel %vm441, 1, 0
        %v454 = vsel %vm442, 1, 0
        %v455 = vadd.s32 %v401, %v443
        %v456 = vadd.s32 %v402, %v444
        %v457 = vadd.s32 %v403, %v445
        %v458 = vadd.s32 %v404, %v446
        %v459 = vadd.s32 %v405, %v447
        %v460 = vadd.s32 %v406, %v448
        %v461 = vadd.s32 %v407, %v449
        %v462 = vadd.s32 %v408, %v450
        %v463 = vadd.s32 %v409, %v451
        %v464 = vadd.s32 %v410, %v452
        %v465 = vadd.s32 %v411, %v453
        %v466 = vadd.s32 %v412, %v454
        %467 = vset.pattern.permute.xlu0 4
        %468 = vperm.xlu0 %467, %v254
        %v469 = vpop.permute.xlu0 %468
        %470 = vset.pattern.permute.xlu0 4
        %471 = vperm.xlu0 %470, %v255
        %v472 = vpop.permute.xlu0 %471
        %473 = vset.pattern.permute.xlu0 4
        %474 = vperm.xlu0 %473, %v256
        %v475 = vpop.permute.xlu0 %474
        %476 = vset.pattern.permute.xlu0 4
        %477 = vperm.xlu0 %476, %v257
        %v478 = vpop.permute.xlu0 %477
        %479 = vset.pattern.permute.xlu0 4
        %480 = vperm.xlu0 %479, %v258
        %v481 = vpop.permute.xlu0 %480
        %482 = vset.pattern.permute.xlu0 4
        %483 = vperm.xlu0 %482, %v259
        %v484 = vpop.permute.xlu0 %483
        %vm485 = vcmp.eq.s32.totalorder %v469, %v261
        %vm486 = vcmp.eq.s32.totalorder %v469, %v262
        %vm487 = vcmp.eq.s32.totalorder %v472, %v261
        %vm488 = vcmp.eq.s32.totalorder %v472, %v262
        %vm489 = vcmp.eq.s32.totalorder %v475, %v261
        %vm490 = vcmp.eq.s32.totalorder %v475, %v262
        %vm491 = vcmp.eq.s32.totalorder %v478, %v261
        %vm492 = vcmp.eq.s32.totalorder %v478, %v262
        %vm493 = vcmp.eq.s32.totalorder %v481, %v261
        %vm494 = vcmp.eq.s32.totalorder %v481, %v262
        %vm495 = vcmp.eq.s32.totalorder %v484, %v261
        %vm496 = vcmp.eq.s32.totalorder %v484, %v262
        %v497 = vsel %vm485, 1, 0
        %v498 = vsel %vm486, 1, 0
        %v499 = vsel %vm487, 1, 0
        %v500 = vsel %vm488, 1, 0
        %v501 = vsel %vm489, 1, 0
        %v502 = vsel %vm490, 1, 0
        %v503 = vsel %vm491, 1, 0
        %v504 = vsel %vm492, 1, 0
        %v505 = vsel %vm493, 1, 0
        %v506 = vsel %vm494, 1, 0
        %v507 = vsel %vm495, 1, 0
        %v508 = vsel %vm496, 1, 0
        %v509 = vadd.s32 %v455, %v497
        %v510 = vadd.s32 %v456, %v498
        %v511 = vadd.s32 %v457, %v499
        %v512 = vadd.s32 %v458, %v500
        %v513 = vadd.s32 %v459, %v501
        %v514 = vadd.s32 %v460, %v502
        %v515 = vadd.s32 %v461, %v503
        %v516 = vadd.s32 %v462, %v504
        %v517 = vadd.s32 %v463, %v505
        %v518 = vadd.s32 %v464, %v506
        %v519 = vadd.s32 %v465, %v507
        %v520 = vadd.s32 %v466, %v508
        %521 = vset.pattern.permute.xlu0 5
        %522 = vperm.xlu0 %521, %v254
        %v523 = vpop.permute.xlu0 %522
        %524 = vset.pattern.permute.xlu0 5
        %525 = vperm.xlu0 %524, %v255
        %v526 = vpop.permute.xlu0 %525
        %527 = vset.pattern.permute.xlu0 5
        %528 = vperm.xlu0 %527, %v256
        %v529 = vpop.permute.xlu0 %528
        %530 = vset.pattern.permute.xlu0 5
        %531 = vperm.xlu0 %530, %v257
        %v532 = vpop.permute.xlu0 %531
        %533 = vset.pattern.permute.xlu0 5
        %534 = vperm.xlu0 %533, %v258
        %v535 = vpop.permute.xlu0 %534
        %536 = vset.pattern.permute.xlu0 5
        %537 = vperm.xlu0 %536, %v259
        %v538 = vpop.permute.xlu0 %537
        %vm539 = vcmp.eq.s32.totalorder %v523, %v261
        %vm540 = vcmp.eq.s32.totalorder %v523, %v262
        %vm541 = vcmp.eq.s32.totalorder %v526, %v261
        %vm542 = vcmp.eq.s32.totalorder %v526, %v262
        %vm543 = vcmp.eq.s32.totalorder %v529, %v261
        %vm544 = vcmp.eq.s32.totalorder %v529, %v262
        %vm545 = vcmp.eq.s32.totalorder %v532, %v261
        %vm546 = vcmp.eq.s32.totalorder %v532, %v262
        %vm547 = vcmp.eq.s32.totalorder %v535, %v261
        %vm548 = vcmp.eq.s32.totalorder %v535, %v262
        %vm549 = vcmp.eq.s32.totalorder %v538, %v261
        %vm550 = vcmp.eq.s32.totalorder %v538, %v262
        %v551 = vsel %vm539, 1, 0
        %v552 = vsel %vm540, 1, 0
        %v553 = vsel %vm541, 1, 0
        %v554 = vsel %vm542, 1, 0
        %v555 = vsel %vm543, 1, 0
        %v556 = vsel %vm544, 1, 0
        %v557 = vsel %vm545, 1, 0
        %v558 = vsel %vm546, 1, 0
        %v559 = vsel %vm547, 1, 0
        %v560 = vsel %vm548, 1, 0
        %v561 = vsel %vm549, 1, 0
        %v562 = vsel %vm550, 1, 0
        %v563 = vadd.s32 %v509, %v551
        %v564 = vadd.s32 %v510, %v552
        %v565 = vadd.s32 %v511, %v553
        %v566 = vadd.s32 %v512, %v554
        %v567 = vadd.s32 %v513, %v555
        %v568 = vadd.s32 %v514, %v556
        %v569 = vadd.s32 %v515, %v557
        %v570 = vadd.s32 %v516, %v558
        %v571 = vadd.s32 %v517, %v559
        %v572 = vadd.s32 %v518, %v560
        %v573 = vadd.s32 %v519, %v561
        %v574 = vadd.s32 %v520, %v562
        %575 = vset.pattern.permute.xlu0 6
        %576 = vperm.xlu0 %575, %v254
        %v577 = vpop.permute.xlu0 %576
        %578 = vset.pattern.permute.xlu0 6
        %579 = vperm.xlu0 %578, %v255
        %v580 = vpop.permute.xlu0 %579
        %581 = vset.pattern.permute.xlu0 6
        %582 = vperm.xlu0 %581, %v256
        %v583 = vpop.permute.xlu0 %582
        %584 = vset.pattern.permute.xlu0 6
        %585 = vperm.xlu0 %584, %v257
        %v586 = vpop.permute.xlu0 %585
        %587 = vset.pattern.permute.xlu0 6
        %588 = vperm.xlu0 %587, %v258
        %v589 = vpop.permute.xlu0 %588
        %590 = vset.pattern.permute.xlu0 6
        %591 = vperm.xlu0 %590, %v259
        %v592 = vpop.permute.xlu0 %591
        %vm593 = vcmp.eq.s32.totalorder %v577, %v261
        %vm594 = vcmp.eq.s32.totalorder %v577, %v262
        %vm595 = vcmp.eq.s32.totalorder %v580, %v261
        %vm596 = vcmp.eq.s32.totalorder %v580, %v262
        %vm597 = vcmp.eq.s32.totalorder %v583, %v261
        %vm598 = vcmp.eq.s32.totalorder %v583, %v262
        %vm599 = vcmp.eq.s32.totalorder %v586, %v261
        %vm600 = vcmp.eq.s32.totalorder %v586, %v262
        %vm601 = vcmp.eq.s32.totalorder %v589, %v261
        %vm602 = vcmp.eq.s32.totalorder %v589, %v262
        %vm603 = vcmp.eq.s32.totalorder %v592, %v261
        %vm604 = vcmp.eq.s32.totalorder %v592, %v262
        %v605 = vsel %vm593, 1, 0
        %v606 = vsel %vm594, 1, 0
        %v607 = vsel %vm595, 1, 0
        %v608 = vsel %vm596, 1, 0
        %v609 = vsel %vm597, 1, 0
        %v610 = vsel %vm598, 1, 0
        %v611 = vsel %vm599, 1, 0
        %v612 = vsel %vm600, 1, 0
        %v613 = vsel %vm601, 1, 0
        %v614 = vsel %vm602, 1, 0
        %v615 = vsel %vm603, 1, 0
        %v616 = vsel %vm604, 1, 0
        %v617 = vadd.s32 %v563, %v605
        %v618 = vadd.s32 %v564, %v606
        %v619 = vadd.s32 %v565, %v607
        %v620 = vadd.s32 %v566, %v608
        %v621 = vadd.s32 %v567, %v609
        %v622 = vadd.s32 %v568, %v610
        %v623 = vadd.s32 %v569, %v611
        %v624 = vadd.s32 %v570, %v612
        %v625 = vadd.s32 %v571, %v613
        %v626 = vadd.s32 %v572, %v614
        %v627 = vadd.s32 %v573, %v615
        %v628 = vadd.s32 %v574, %v616
        %629 = vset.pattern.permute.xlu0 7
        %630 = vperm.xlu0 %629, %v254
        %v631 = vpop.permute.xlu0 %630
        %632 = vset.pattern.permute.xlu0 7
        %633 = vperm.xlu0 %632, %v255
        %v634 = vpop.permute.xlu0 %633
        %635 = vset.pattern.permute.xlu0 7
        %636 = vperm.xlu0 %635, %v256
        %v637 = vpop.permute.xlu0 %636
        %638 = vset.pattern.permute.xlu0 7
        %639 = vperm.xlu0 %638, %v257
        %v640 = vpop.permute.xlu0 %639
        %641 = vset.pattern.permute.xlu0 7
        %642 = vperm.xlu0 %641, %v258
        %v643 = vpop.permute.xlu0 %642
        %644 = vset.pattern.permute.xlu0 7
        %645 = vperm.xlu0 %644, %v259
        %v646 = vpop.permute.xlu0 %645
        %vm647 = vcmp.eq.s32.totalorder %v631, %v261
        %vm648 = vcmp.eq.s32.totalorder %v631, %v262
        %vm649 = vcmp.eq.s32.totalorder %v634, %v261
        %vm650 = vcmp.eq.s32.totalorder %v634, %v262
        %vm651 = vcmp.eq.s32.totalorder %v637, %v261
        %vm652 = vcmp.eq.s32.totalorder %v637, %v262
        %vm653 = vcmp.eq.s32.totalorder %v640, %v261
        %vm654 = vcmp.eq.s32.totalorder %v640, %v262
        %vm655 = vcmp.eq.s32.totalorder %v643, %v261
        %vm656 = vcmp.eq.s32.totalorder %v643, %v262
        %vm657 = vcmp.eq.s32.totalorder %v646, %v261
        %vm658 = vcmp.eq.s32.totalorder %v646, %v262
        %v659 = vsel %vm647, 1, 0
        %v660 = vsel %vm648, 1, 0
        %v661 = vsel %vm649, 1, 0
        %v662 = vsel %vm650, 1, 0
        %v663 = vsel %vm651, 1, 0
        %v664 = vsel %vm652, 1, 0
        %v665 = vsel %vm653, 1, 0
        %v666 = vsel %vm654, 1, 0
        %v667 = vsel %vm655, 1, 0
        %v668 = vsel %vm656, 1, 0
        %v669 = vsel %vm657, 1, 0
        %v670 = vsel %vm658, 1, 0
        %v671 = vadd.s32 %v617, %v659
        %v672 = vadd.s32 %v618, %v660
        %v673 = vadd.s32 %v619, %v661
        %v674 = vadd.s32 %v620, %v662
        %v675 = vadd.s32 %v621, %v663
        %v676 = vadd.s32 %v622, %v664
        %v677 = vadd.s32 %v623, %v665
        %v678 = vadd.s32 %v624, %v666
        %v679 = vadd.s32 %v625, %v667
        %v680 = vadd.s32 %v626, %v668
        %v681 = vadd.s32 %v627, %v669
        %v682 = vadd.s32 %v628, %v670
        %v683 = vcvt.s32.f32 %v671
        %v684 = vcvt.s32.f32 %v672
        %v685 = vcvt.s32.f32 %v673
        %v686 = vcvt.s32.f32 %v674
        %v687 = vcvt.s32.f32 %v675
        %v688 = vcvt.s32.f32 %v676
        %v689 = vcvt.s32.f32 %v677
        %v690 = vcvt.s32.f32 %v678
        %v691 = vcvt.s32.f32 %v679
        %v692 = vcvt.s32.f32 %v680
        %v693 = vcvt.s32.f32 %v681
        %v694 = vcvt.s32.f32 %v682
        %v695 = vpack.c.bf16 %v685, %v683
        %v696 = vpack.c.bf16 %v686, %v684
        %v697 = vpack.c.bf16 %v689, %v687
        %v698 = vpack.c.bf16 %v690, %v688
        %v699 = vpack.c.bf16 %v693, %v691
        %v700 = vpack.c.bf16 %v694, %v692
        %v701 = vld [vmem:[%s1] sm:$0xf]
        %v702 = vld [vmem:[%s1 + $0x4] sm:$0xf]
        %v703 = vld [vmem:[%s1 + $0x8] sm:$0xf]
        %v704 = vld [vmem:[%s1 + $0xc] sm:$0xf]
        %v705 = vld [vmem:[%s1 + $0x10] sm:$0xf]
        %v706 = vld [vmem:[%s1 + $0x14] sm:$0xf]
        %v707 = vld [vmem:[%s1 + $0x18] sm:$0xf]
        %v708 = vld [vmem:[%s1 + $0x1c] sm:$0xf]
        %v709 = vld [vmem:[%s1 + $0x20] sm:$0xf]
        %v710 = vld [vmem:[%s1 + $0x24] sm:$0xf]
        %v711 = vld [vmem:[%s1 + $0x28] sm:$0xf]
        %v712 = vld [vmem:[%s1 + $0x2c] sm:$0xf]
        %v713 = vld [vmem:[%s1 + $0x30] sm:$0xf]
        %v714 = vld [vmem:[%s1 + $0x34] sm:$0xf]
        %v715 = vld [vmem:[%s1 + $0x38] sm:$0xf]
        %v716 = vld [vmem:[%s1 + $0x3c] sm:$0xf]
        %v717 = vld [vmem:[%s1 + $0x40] sm:$0xf]
        %v718 = vld [vmem:[%s1 + $0x44] sm:$0xf]
        %v719 = vld [vmem:[%s1 + $0x48] sm:$0xf]
        %v720 = vld [vmem:[%s1 + $0x4c] sm:$0xf]
        %v721 = vld [vmem:[%s1 + $0x50] sm:$0xf]
        %v722 = vld [vmem:[%s1 + $0x54] sm:$0xf]
        %v723 = vld [vmem:[%s1 + $0x58] sm:$0xf]
        %v724 = vld [vmem:[%s1 + $0x5c] sm:$0xf]
        %v725 = vld [vmem:[%s1 + $0x60] sm:$0xf]
        %v726 = vld [vmem:[%s1 + $0x64] sm:$0xf]
        %v727 = vld [vmem:[%s1 + $0x68] sm:$0xf]
        %v728 = vld [vmem:[%s1 + $0x6c] sm:$0xf]
        %v729 = vld [vmem:[%s1 + $0x70] sm:$0xf]
        %v730 = vld [vmem:[%s1 + $0x74] sm:$0xf]
        %v731 = vld [vmem:[%s1 + $0x78] sm:$0xf]
        %v732 = vld [vmem:[%s1 + $0x7c] sm:$0xf]
        %v765 = vunpack.c.l.b16 %v701
        %v766 = vunpack.c.l.b16 %v702
        %v767 = vunpack.c.l.b16 %v703
        %v768 = vunpack.c.l.b16 %v704
        %v769 = vunpack.c.l.b16 %v705
        %v770 = vunpack.c.l.b16 %v706
        %v771 = vunpack.c.l.b16 %v707
        %v772 = vunpack.c.l.b16 %v708
        %v773 = vunpack.c.l.b16 %v709
        %v774 = vunpack.c.l.b16 %v710
        %v775 = vunpack.c.l.b16 %v711
        %v776 = vunpack.c.l.b16 %v712
        %v777 = vunpack.c.l.b16 %v713
        %v778 = vunpack.c.l.b16 %v714
        %v779 = vunpack.c.l.b16 %v715
        %v780 = vunpack.c.l.b16 %v716
        %v781 = vunpack.c.l.b16 %v717
        %v782 = vunpack.c.l.b16 %v718
        %v783 = vunpack.c.l.b16 %v719
        %v784 = vunpack.c.l.b16 %v720
        %v785 = vunpack.c.l.b16 %v721
        %v786 = vunpack.c.l.b16 %v722
        %v787 = vunpack.c.l.b16 %v723
        %v788 = vunpack.c.l.b16 %v724
        %v789 = vunpack.c.l.b16 %v725
        %v790 = vunpack.c.l.b16 %v726
        %v791 = vunpack.c.l.b16 %v727
        %v792 = vunpack.c.l.b16 %v728
        %v793 = vunpack.c.l.b16 %v729
        %v794 = vunpack.c.l.b16 %v730
        %v795 = vunpack.c.l.b16 %v731
        %v796 = vunpack.c.l.b16 %v732
        %v797 = vpack.c.b16 %v766, %v765
        %v798 = vpack.c.b16 %v768, %v767
        %v799 = vpack.c.b16 %v770, %v769
        %v800 = vpack.c.b16 %v772, %v771
        %v801 = vpack.c.b16 %v774, %v773
        %v802 = vpack.c.b16 %v776, %v775
        %v803 = vpack.c.b16 %v778, %v777
        %v804 = vpack.c.b16 %v780, %v779
        %v805 = vpack.c.b16 %v782, %v781
        %v806 = vpack.c.b16 %v784, %v783
        %v807 = vpack.c.b16 %v786, %v785
        %v808 = vpack.c.b16 %v788, %v787
        %v809 = vpack.c.b16 %v790, %v789
        %v810 = vpack.c.b16 %v792, %v791
        %v811 = vpack.c.b16 %v794, %v793
        %v812 = vpack.c.b16 %v796, %v795
        %829 = vmatprep.subr.bf16.mxu0 0
        %830 = vmatpush1.bf16.msra.mxu0 %v804
        %831 = vmatprep.subr.bf16.mxu0 0
        %832 = vmatpush1.bf16.msra.mxu0 %v803
        %833 = vmatprep.subr.bf16.mxu0 0
        %834 = vmatpush1.bf16.msra.mxu0 %v802
        %835 = vmatprep.subr.bf16.mxu0 0
        %836 = vmatpush1.bf16.msra.mxu0 %v801
        %837 = vmatprep.subr.bf16.mxu0 0
        %838 = vmatpush1.bf16.msra.mxu0 %v800
        %839 = vmatprep.subr.bf16.mxu0 0
        %840 = vmatpush1.bf16.msra.mxu0 %v799
        %841 = vmatprep.subr.bf16.mxu0 0
        %842 = vmatpush1.bf16.msra.mxu0 %v798
        %843 = vmatprep.subr.bf16.mxu0 0
        %844 = vmatpush1.bf16.msra.mxu0 %v797
        %845 = vmatprep.subr.bf16.mxu0 0
        %846 = vmatpush2.bf16.msra.mxu0 %v812
        %847 = vmatprep.subr.bf16.mxu0 0
        %848 = vmatpush2.bf16.msra.mxu0 %v811
        %849 = vmatprep.subr.bf16.mxu0 0
        %850 = vmatpush2.bf16.msra.mxu0 %v810
        %851 = vmatprep.subr.bf16.mxu0 0
        %852 = vmatpush2.bf16.msra.mxu0 %v809
        %853 = vmatprep.subr.bf16.mxu0 0
        %854 = vmatpush2.bf16.msra.mxu0 %v808
        %855 = vmatprep.subr.bf16.mxu0 0
        %856 = vmatpush2.bf16.msra.mxu0 %v807
        %857 = vmatprep.subr.bf16.mxu0 0
        %858 = vmatpush2.bf16.msra.mxu0 %v806
        %859 = vmatprep.subr.bf16.mxu0 0
        %860 = vmatpush2.bf16.msra.mxu0 %v805
        %861 = vmatprep.mubr.bf16.mxu0 %v696
        %862 = vmatmul.mubr.bf16.gmra.mxu0 %v695
        %v863 = vpop.f32.mrf.mxu0
        %v864 = vadd.f32 0.0, %v863
        %v865 = vpop.f32.mrf.mxu0
        %v866 = vpop.f32.mrf.mxu0
        %v867 = vadd.f32 0.0, %v866
        %v868 = vpop.f32.mrf.mxu0
        %869 = vmatprep.mubr.bf16.mxu0 %v698
        %870 = vmatmul.mubr.bf16.gmra.mxu0 %v697
        %v871 = vpop.f32.mrf.mxu0
        %v872 = vadd.f32 0.0, %v871
        %v873 = vpop.f32.mrf.mxu0
        %v874 = vpop.f32.mrf.mxu0
        %v875 = vadd.f32 0.0, %v874
        %v876 = vpop.f32.mrf.mxu0
        %877 = vmatprep.mubr.bf16.mxu0 %v700
        %878 = vmatmul.mubr.bf16.gmra.mxu0 %v699
        %v879 = vpop.f32.mrf.mxu0
        %v880 = vadd.f32 0.0, %v879
        %v881 = vpop.f32.mrf.mxu0
        %v882 = vpop.f32.mrf.mxu0
        %v883 = vadd.f32 0.0, %v882
        %v884 = vpop.f32.mrf.mxu0
        %885 = vdwg.mxu0
        %v886 = vpack.c.bf16 %v867, %v864
        %v887 = vpack.c.bf16 %v875, %v872
        %v888 = vpack.c.bf16 %v883, %v880
        %v889 = vld [vmem:[%s2] sm:$0xf]
        %v890 = vld [vmem:[%s2 + $0x4] sm:$0xf]
        %v891 = vld [vmem:[%s2 + $0x8] sm:$0xf]
        %v892 = vld [vmem:[%s2 + $0xc] sm:$0xf]
        %v893 = vld [vmem:[%s3] sm:$0x1]
        %v895 = vlaneseq
        %v896 = vshrl.u32 %v895, 7
        %v897 = vsub.s32 0, %v896
        %v898 = vrot.slane %v893, %v897
        %v904 = vunpack.c.l.b16 %v889
        %v905 = vunpack.c.l.b16 %v890
        %v906 = vunpack.c.l.b16 %v891
        %v907 = vunpack.c.l.b16 %v892
        %v908 = vpack.c.b16 %v905, %v904
        %v909 = vpack.c.b16 %v907, %v906
        %vm912 = vcmask 261120
        %v914 = vsel %vm912, %v886, 0
        %v917 = vsel %vm912, %v887, 0
        %v920 = vsel %vm912, %v888, 0
        %922 = vmatprep.subr.bf16.mxu0 0
        %923 = vmatpush1.bf16.msra.mxu0 0
        %924 = vmatprep.subr.bf16.mxu0 0
        %925 = vmatpush1.bf16.msra.mxu0 0
        %926 = vmatprep.subr.bf16.mxu0 0
        %927 = vmatpush1.bf16.msra.mxu0 0
        %928 = vmatprep.subr.bf16.mxu0 0
        %929 = vmatpush1.bf16.msra.mxu0 0
        %930 = vmatprep.subr.bf16.mxu0 0
        %931 = vmatpush1.bf16.msra.mxu0 0
        %932 = vmatprep.subr.bf16.mxu0 0
        %933 = vmatpush1.bf16.msra.mxu0 0
        %934 = vmatprep.subr.bf16.mxu0 0
        %935 = vmatpush1.bf16.msra.mxu0 %v909
        %936 = vmatprep.subr.bf16.mxu0 0
        %937 = vmatpush1.bf16.msra.mxu0 %v908
        %938 = vmatprep.subr.bf16.mxu0 0
        %939 = vmatpush2.bf16.msra.mxu0 0
        %940 = vmatprep.subr.bf16.mxu0 0
        %941 = vmatpush2.bf16.msra.mxu0 0
        %942 = vmatprep.subr.bf16.mxu0 0
        %943 = vmatpush2.bf16.msra.mxu0 0
        %944 = vmatprep.subr.bf16.mxu0 0
        %945 = vmatpush2.bf16.msra.mxu0 0
        %946 = vmatprep.subr.bf16.mxu0 0
        %947 = vmatpush2.bf16.msra.mxu0 0
        %948 = vmatprep.subr.bf16.mxu0 0
        %949 = vmatpush2.bf16.msra.mxu0 0
        %950 = vmatprep.subr.bf16.mxu0 0
        %951 = vmatpush2.bf16.msra.mxu0 0
        %952 = vmatprep.subr.bf16.mxu0 0
        %953 = vmatpush2.bf16.msra.mxu0 0
        %954 = vmatprep.mubr.bf16.mxu0 0
        %955 = vmatmul.mubr.bf16.gmra.mxu0 %v914
        %v956 = vpop.f32.mrf.mxu0
        %v957 = vadd.f32 %v898, %v956
        %v958 = vpop.f32.mrf.mxu0
        %v959 = vpop.f32.mrf.mxu0
        %v960 = vadd.f32 %v898, %v959
        %v961 = vpop.f32.mrf.mxu0
        %962 = vmatprep.mubr.bf16.mxu0 0
        %963 = vmatmul.mubr.bf16.gmra.mxu0 %v917
        %v964 = vpop.f32.mrf.mxu0
        %v965 = vadd.f32 %v898, %v964
        %v966 = vpop.f32.mrf.mxu0
        %v967 = vpop.f32.mrf.mxu0
        %v968 = vadd.f32 %v898, %v967
        %v969 = vpop.f32.mrf.mxu0
        %970 = vmatprep.mubr.bf16.mxu0 0
        %971 = vmatmul.mubr.bf16.gmra.mxu0 %v920
        %v972 = vpop.f32.mrf.mxu0
        %v973 = vadd.f32 %v898, %v972
        %v974 = vpop.f32.mrf.mxu0
        %v975 = vpop.f32.mrf.mxu0
        %v976 = vadd.f32 %v898, %v975
        %v977 = vpop.f32.mrf.mxu0
        %978 = vdwg.mxu0
        %v979 = vmax.f32 %v957, 0.0
        %v980 = vmax.f32 %v960, 0.0
        %v981 = vmax.f32 %v965, 0.0
        %v982 = vmax.f32 %v968, 0.0
        %v983 = vmax.f32 %v973, 0.0
        %v984 = vmax.f32 %v976, 0.0
        %v985 = vpack.c.bf16 %v980, %v979
        %v986 = vpack.c.bf16 %v982, %v981
        %v987 = vpack.c.bf16 %v984, %v983
        %v988 = vld [vmem:[%s4] sm:$0xff]
        %v989 = vld [vmem:[%s4 + $0x8] sm:$0xff]
        %v990 = vld [vmem:[%s4 + $0x10] sm:$0xff]
        %v991 = vld [vmem:[%s4 + $0x18] sm:$0xff]
        %v992 = vld [vmem:[%s4 + $0x20] sm:$0xff]
        %v993 = vld [vmem:[%s4 + $0x28] sm:$0xff]
        %v994 = vld [vmem:[%s4 + $0x30] sm:$0xff]
        %v995 = vld [vmem:[%s4 + $0x38] sm:$0xff]
        %v996 = vld [vmem:[%s4 + $0x40] sm:$0xff]
        %v997 = vld [vmem:[%s4 + $0x48] sm:$0xff]
        %v998 = vld [vmem:[%s4 + $0x50] sm:$0xff]
        %v999 = vld [vmem:[%s4 + $0x58] sm:$0xff]
        %v1000 = vld [vmem:[%s4 + $0x60] sm:$0xff]
        %v1001 = vld [vmem:[%s4 + $0x68] sm:$0xff]
        %v1002 = vld [vmem:[%s4 + $0x70] sm:$0xff]
        %v1003 = vld [vmem:[%s4 + $0x78] sm:$0xff]
        %v1004 = vld [vmem:[%s5] sm:$0x3]
        %v1006 = vlaneseq
        %v1007 = vshrl.u32 %v1006, 7
        %v1008 = vsub.s32 0, %v1007
        %v1009 = vrot.slane %v1004, %v1008
        %v1010 = vlaneseq
        %v1011 = vshrl.u32 %v1010, 7
        %v1012 = vsub.s32 1, %v1011
        %v1013 = vrot.slane %v1004, %v1012
        %v1032 = vunpack.c.l.b16 %v988
        %v1033 = vunpack.c.h.b16 %v988
        %v1034 = vunpack.c.l.b16 %v989
        %v1035 = vunpack.c.h.b16 %v989
        %v1036 = vunpack.c.l.b16 %v990
        %v1037 = vunpack.c.h.b16 %v990
        %v1038 = vunpack.c.l.b16 %v991
        %v1039 = vunpack.c.h.b16 %v991
        %v1040 = vunpack.c.l.b16 %v992
        %v1041 = vunpack.c.h.b16 %v992
        %v1042 = vunpack.c.l.b16 %v993
        %v1043 = vunpack.c.h.b16 %v993
        %v1044 = vunpack.c.l.b16 %v994
        %v1045 = vunpack.c.h.b16 %v994
        %v1046 = vunpack.c.l.b16 %v995
        %v1047 = vunpack.c.h.b16 %v995
        %v1048 = vunpack.c.l.b16 %v996
        %v1049 = vunpack.c.h.b16 %v996
        %v1050 = vunpack.c.l.b16 %v997
        %v1051 = vunpack.c.h.b16 %v997
        %v1052 = vunpack.c.l.b16 %v998
        %v1053 = vunpack.c.h.b16 %v998
        %v1054 = vunpack.c.l.b16 %v999
        %v1055 = vunpack.c.h.b16 %v999
        %v1056 = vunpack.c.l.b16 %v1000
        %v1057 = vunpack.c.h.b16 %v1000
        %v1058 = vunpack.c.l.b16 %v1001
        %v1059 = vunpack.c.h.b16 %v1001
        %v1060 = vunpack.c.l.b16 %v1002
        %v1061 = vunpack.c.h.b16 %v1002
        %v1062 = vunpack.c.l.b16 %v1003
        %v1063 = vunpack.c.h.b16 %v1003
        %v1064 = vpack.c.b16 %v1034, %v1032
        %v1065 = vpack.c.b16 %v1035, %v1033
        %v1066 = vpack.c.b16 %v1038, %v1036
        %v1067 = vpack.c.b16 %v1039, %v1037
        %v1068 = vpack.c.b16 %v1042, %v1040
        %v1069 = vpack.c.b16 %v1043, %v1041
        %v1070 = vpack.c.b16 %v1046, %v1044
        %v1071 = vpack.c.b16 %v1047, %v1045
        %v1072 = vpack.c.b16 %v1050, %v1048
        %v1073 = vpack.c.b16 %v1051, %v1049
        %v1074 = vpack.c.b16 %v1054, %v1052
        %v1075 = vpack.c.b16 %v1055, %v1053
        %v1076 = vpack.c.b16 %v1058, %v1056
        %v1077 = vpack.c.b16 %v1059, %v1057
        %v1078 = vpack.c.b16 %v1062, %v1060
        %v1079 = vpack.c.b16 %v1063, %v1061
        %1096 = vmatprep.subr.bf16.mxu0 %v1079
        %1097 = vmatpush1.bf16.msra.mxu0 %v1078
        %1098 = vmatprep.subr.bf16.mxu0 %v1077
        %1099 = vmatpush1.bf16.msra.mxu0 %v1076
        %1100 = vmatprep.subr.bf16.mxu0 %v1075
        %1101 = vmatpush1.bf16.msra.mxu0 %v1074
        %1102 = vmatprep.subr.bf16.mxu0 %v1073
        %1103 = vmatpush1.bf16.msra.mxu0 %v1072
        %1104 = vmatprep.subr.bf16.mxu0 %v1071
        %1105 = vmatpush1.bf16.msra.mxu0 %v1070
        %1106 = vmatprep.subr.bf16.mxu0 %v1069
        %1107 = vmatpush1.bf16.msra.mxu0 %v1068
        %1108 = vmatprep.subr.bf16.mxu0 %v1067
        %1109 = vmatpush1.bf16.msra.mxu0 %v1066
        %1110 = vmatprep.subr.bf16.mxu0 %v1065
        %1111 = vmatpush1.bf16.msra.mxu0 %v1064
        %1112 = vmatprep.subr.bf16.mxu0 0
        %1113 = vmatpush2.bf16.msra.mxu0 0
        %1114 = vmatprep.subr.bf16.mxu0 0
        %1115 = vmatpush2.bf16.msra.mxu0 0
        %1116 = vmatprep.subr.bf16.mxu0 0
        %1117 = vmatpush2.bf16.msra.mxu0 0
        %1118 = vmatprep.subr.bf16.mxu0 0
        %1119 = vmatpush2.bf16.msra.mxu0 0
        %1120 = vmatprep.subr.bf16.mxu0 0
        %1121 = vmatpush2.bf16.msra.mxu0 0
        %1122 = vmatprep.subr.bf16.mxu0 0
        %1123 = vmatpush2.bf16.msra.mxu0 0
        %1124 = vmatprep.subr.bf16.mxu0 0
        %1125 = vmatpush2.bf16.msra.mxu0 0
        %1126 = vmatprep.subr.bf16.mxu0 0
        %1127 = vmatpush2.bf16.msra.mxu0 0
        %1128 = vmatprep.mubr.bf16.mxu0 0
        %1129 = vmatmul.mubr.bf16.gmra.mxu0 %v985
        %v1130 = vpop.f32.mrf.mxu0
        %v1131 = vadd.f32 %v1009, %v1130
        %v1132 = vpop.f32.mrf.mxu0
        %v1133 = vadd.f32 %v1013, %v1132
        %v1134 = vpop.f32.mrf.mxu0
        %v1135 = vadd.f32 %v1009, %v1134
        %v1136 = vpop.f32.mrf.mxu0
        %v1137 = vadd.f32 %v1013, %v1136
        %1138 = vmatprep.mubr.bf16.mxu0 0
        %1139 = vmatmul.mubr.bf16.gmra.mxu0 %v986
        %v1140 = vpop.f32.mrf.mxu0
        %v1141 = vadd.f32 %v1009, %v1140
        %v1142 = vpop.f32.mrf.mxu0
        %v1143 = vadd.f32 %v1013, %v1142
        %v1144 = vpop.f32.mrf.mxu0
        %v1145 = vadd.f32 %v1009, %v1144
        %v1146 = vpop.f32.mrf.mxu0
        %v1147 = vadd.f32 %v1013, %v1146
        %1148 = vmatprep.mubr.bf16.mxu0 0
        %1149 = vmatmul.mubr.bf16.gmra.mxu0 %v987
        %v1150 = vpop.f32.mrf.mxu0
        %v1151 = vadd.f32 %v1009, %v1150
        %v1152 = vpop.f32.mrf.mxu0
        %v1153 = vadd.f32 %v1013, %v1152
        %v1154 = vpop.f32.mrf.mxu0
        %v1155 = vadd.f32 %v1009, %v1154
        %v1156 = vpop.f32.mrf.mxu0
        %v1157 = vadd.f32 %v1013, %v1156
        %1158 = vdwg.mxu0
        %v1159 = vmax.f32 %v1131, %v1133
        %1160 = vmax.xlane.f32.xlu0 %v1159
        %v1161 = vpop.xlane.xlu0 %1160
        %v1162 = vmax.f32 %v1135, %v1137
        %1163 = vmax.xlane.f32.xlu0 %v1162
        %v1164 = vpop.xlane.xlu0 %1163
        %v1165 = vmax.f32 %v1141, %v1143
        %1166 = vmax.xlane.f32.xlu0 %v1165
        %v1167 = vpop.xlane.xlu0 %1166
        %v1168 = vmax.f32 %v1145, %v1147
        %1169 = vmax.xlane.f32.xlu0 %v1168
        %v1170 = vpop.xlane.xlu0 %1169
        %v1171 = vmax.f32 %v1151, %v1153
        %1172 = vmax.xlane.f32.xlu0 %v1171
        %v1173 = vpop.xlane.xlu0 %1172
        %v1174 = vmax.f32 %v1155, %v1157
        %1175 = vmax.xlane.f32.xlu0 %v1174
        %v1176 = vpop.xlane.xlu0 %1175
        %v1177 = vsub.f32 %v1131, %v1161
        %v1178 = vsub.f32 %v1133, %v1161
        %v1179 = vsub.f32 %v1135, %v1164
        %v1180 = vsub.f32 %v1137, %v1164
        %v1181 = vsub.f32 %v1141, %v1167
        %v1182 = vsub.f32 %v1143, %v1167
        %v1183 = vsub.f32 %v1145, %v1170
        %v1184 = vsub.f32 %v1147, %v1170
        %v1185 = vsub.f32 %v1151, %v1173
        %v1186 = vsub.f32 %v1153, %v1173
        %v1187 = vsub.f32 %v1155, %v1176
        %v1188 = vsub.f32 %v1157, %v1176
        %v1189 = vmul.f32 %v1177, 1.442695
        %v1190 = vpow.pop %v1189
        %v1191 = vmul.f32 %v1178, 1.442695
        %v1192 = vpow.pop %v1191
        %v1193 = vmul.f32 %v1179, 1.442695
        %v1194 = vpow.pop %v1193
        %v1195 = vmul.f32 %v1180, 1.442695
        %v1196 = vpow.pop %v1195
        %v1197 = vmul.f32 %v1181, 1.442695
        %v1198 = vpow.pop %v1197
        %v1199 = vmul.f32 %v1182, 1.442695
        %v1200 = vpow.pop %v1199
        %v1201 = vmul.f32 %v1183, 1.442695
        %v1202 = vpow.pop %v1201
        %v1203 = vmul.f32 %v1184, 1.442695
        %v1204 = vpow.pop %v1203
        %v1205 = vmul.f32 %v1185, 1.442695
        %v1206 = vpow.pop %v1205
        %v1207 = vmul.f32 %v1186, 1.442695
        %v1208 = vpow.pop %v1207
        %v1209 = vmul.f32 %v1187, 1.442695
        %v1210 = vpow.pop %v1209
        %v1211 = vmul.f32 %v1188, 1.442695
        %v1212 = vpow.pop %v1211
        %v1213 = vadd.f32 %v1190, %v1192
        %1214 = vadd.xlane.f32.xlu0 %v1213
        %v1215 = vpop.xlane.xlu0 %1214
        %v1216 = vadd.f32 %v1194, %v1196
        %1217 = vadd.xlane.f32.xlu0 %v1216
        %v1218 = vpop.xlane.xlu0 %1217
        %v1219 = vadd.f32 %v1198, %v1200
        %1220 = vadd.xlane.f32.xlu0 %v1219
        %v1221 = vpop.xlane.xlu0 %1220
        %v1222 = vadd.f32 %v1202, %v1204
        %1223 = vadd.xlane.f32.xlu0 %v1222
        %v1224 = vpop.xlane.xlu0 %1223
        %v1225 = vadd.f32 %v1206, %v1208
        %1226 = vadd.xlane.f32.xlu0 %v1225
        %v1227 = vpop.xlane.xlu0 %1226
        %v1228 = vadd.f32 %v1210, %v1212
        %1229 = vadd.xlane.f32.xlu0 %v1228
        %v1230 = vpop.xlane.xlu0 %1229
        %v1231 = vlog2.pop %v1215
        %v1232 = vmul.f32 %v1231, 0.6931472
        %v1233 = vlog2.pop %v1218
        %v1234 = vmul.f32 %v1233, 0.6931472
        %v1235 = vlog2.pop %v1221
        %v1236 = vmul.f32 %v1235, 0.6931472
        %v1237 = vlog2.pop %v1224
        %v1238 = vmul.f32 %v1237, 0.6931472
        %v1239 = vlog2.pop %v1227
        %v1240 = vmul.f32 %v1239, 0.6931472
        %v1241 = vlog2.pop %v1230
        %v1242 = vmul.f32 %v1241, 0.6931472
        %v1243 = vsub.f32 %v1177, %v1232
        %v1244 = vsub.f32 %v1178, %v1232
        %v1245 = vsub.f32 %v1179, %v1234
        %v1246 = vsub.f32 %v1180, %v1234
        %v1247 = vsub.f32 %v1181, %v1236
        %v1248 = vsub.f32 %v1182, %v1236
        %v1249 = vsub.f32 %v1183, %v1238
        %v1250 = vsub.f32 %v1184, %v1238
        %v1251 = vsub.f32 %v1185, %v1240
        %v1252 = vsub.f32 %v1186, %v1240
        %v1253 = vsub.f32 %v1187, %v1242
        %v1254 = vsub.f32 %v1188, %v1242
        %1255 = vst [vmem:[%s245] sm:$0xff] %v1243
        %1256 = vst [vmem:[%s245 + $0x8] sm:$0xff] %v1244
        %1257 = vst [vmem:[%s245 + $0x10] sm:$0xff] %v1245
        %1258 = vst [vmem:[%s245 + $0x18] sm:$0xff] %v1246
        %1259 = vst [vmem:[%s245 + $0x20] sm:$0xff] %v1247
        %1260 = vst [vmem:[%s245 + $0x28] sm:$0xff] %v1248
        %1261 = vst [vmem:[%s245 + $0x30] sm:$0xff] %v1249
        %1262 = vst [vmem:[%s245 + $0x38] sm:$0xff] %v1250
        %1263 = vst [vmem:[%s245 + $0x40] sm:$0xff] %v1251
        %1264 = vst [vmem:[%s245 + $0x48] sm:$0xff] %v1252
        %1265 = vst [vmem:[%s245 + $0x50] sm:$0xff] %v1253
        %1266 = vst [vmem:[%s245 + $0x58] sm:$0xff] %v1254
        %s1267 = sand.u32 %s159, 1
        %s1268 = scalar_lea.sflag [#allocation3], %s1267
        %s1269 = sand.u32 %s159, 1
        %s1270 = smul.addr %s1269, 96
        %s1271 = scalar_lea.vmem [#allocation2], %s1270
        // Predicated region
        $region45: #{tpu_custom_call.1} parent=43 // pred_check
          %p1272 = pneg %p169
        $region46: #{tpu_custom_call.1} parent=43 // pred_check_branch
          %1274 = sbr.rel (%p1272) target = $region48
        $region47: #{tpu_custom_call.1} parent=43 // pred_region
          %s1275 = smul.u32 6, %s20
          %s1277 = ssub.s32 1536, 1536
          %1278 = vsyncadd %s1268, %s1277
          %s1279 = smul.addr %s1275, 2
          %s1280 = smul.addr %s1279, 128
          %s1281 = scalar_lea.hbm %s6, %s1280
          %s1282 = sshll.u32 %s1271, 4
          %s1283 = int_to_ptr.vmem [resolvable:$true] %s1282
          %1288 = dma.vmem_to_hbm [thread:$0]  %s1283, 1536, %s1281, %s1268, 256, 256, 16
        $region48: #{tpu_custom_call.1} parent=43 // pred_fallthru
          _
      $region44: #{tpu_custom_call.1} parent=5 // pred_fallthru
        _
      %p1289 = scmp.le.s32.totalorder 2, %s15
      // Predicated region
      $region49: #{tpu_custom_call.1} parent=5 // pred_check
        %p1290 = pneg %p1289
      $region50: #{tpu_custom_call.1} parent=5 // pred_check_branch
        %1292 = sbr.rel (%p1290) target = $region52
      $region51: #{tpu_custom_call.1} parent=5 // pred_region
        %s1293 = ssub.s32 %s15, 2
        // Predicated region
        $region53: #{tpu_custom_call.1} parent=51 // pred_check
          %p1294 = pneg %p175
        $region54: #{tpu_custom_call.1} parent=51 // pred_check_branch
          %1296 = sbr.rel (%p1294) target = $region56
        $region55: #{tpu_custom_call.1} parent=51 // pred_region
          %s1297 = sand.u32 %s160, 1
          %s1298 = scalar_lea.sflag [#allocation3], %s1297
          %s1299 = sand.u32 %s160, 1
          %s1300 = smul.addr %s1299, 96
          %s1301 = scalar_lea.vmem [#allocation2], %s1300
          %1302 = dma.done %s1298, 1536
        $region56: #{tpu_custom_call.1} parent=51 // pred_fallthru
          _
      $region52: #{tpu_custom_call.1} parent=5 // pred_fallthru
        _
    $region6: #{tpu_custom_call.1} parent=1 // loop_footer
      %s19 = sadd.s32 1, %s15
    $region7: #{tpu_custom_call.1} parent=1 // loop_footer_branch
      %14 = sbr.rel target = $region3
    $region8: #{tpu_custom_call.1} parent=1 // loop_exit
      _
    %1303 = vsyncpa [#allocation3], 1
    %s1304 = scalar_lea.sflag [#allocation3], 1
    %1305 = vsyncpa %s1304, 1

</llo_original>
